<compile_context>
chip_gen: v5e
topology: v5e:2x2
jax: 0.10.0
libtpu: 0.0.40
codegen_flags: <defaults>
</compile_context>

<pallas_src>
import numpy as np
import jax
import jax.numpy as jnp
from jax.experimental import pallas as pl
from jax.experimental.pallas import tpu as pltpu


_SMALL_BYTES = 4 * 1024 * 1024          # below this: single-block lane-dense flat path
_TARGET_BLOCK_BYTES = 2 * 1024 * 1024   # per-block HBM slab target for the 3D path


def _initialize_pe_weight(dim: int, max_len: int) -> jnp.ndarray:
    """Replicates AddPositionalEncoding._initialize_weight exactly (same expression:
    `2 * i // 2` == i, pos/i starting at 1, sin on odd columns / cos on even)."""
    def get_pe(pos: int, i: int) -> float:
        w = pos / 10000 ** (2 * i // 2 / dim)   # identical to the PyTorch module
        return float(np.sin(w)) if i % 2 == 0 else float(np.cos(w))

    table = [[get_pe(pos, i) for i in range(1, dim + 1)]
             for pos in range(1, max_len + 1)]
    return jnp.asarray(np.array(table, dtype=np.float32))


# ------------------------------- kernel --------------------------------------

def _add_pe_kernel(x_ref, pe_ref, o_ref):
    # x_ref: (Tb, Ts, D) [or (B, N)], pe_ref: (Ts, D) [or (1, N)] -> broadcast add
    # over the leading (batch) dim.  PE is already in x.dtype.
    o_ref[...] = x_ref[...] + pe_ref[...]


# --------------------------- budgets / tiling ---------------------------------

def _vmem_budgets():
    """(vmem_limit_bytes, tile_budget_bytes), generation-aware."""
    try:
        cap = getattr(pltpu.get_tpu_info(), "vmem_capacity_bytes", 64 * 1024 * 1024)
    except Exception:  # pragma: no cover - e.g. interpret mode / older jax
        cap = 64 * 1024 * 1024
    if cap >= 128 * 1024 * 1024:                 # v5e / v6e: 128 MiB physical
        return 64 * 1024 * 1024, 40 * 1024 * 1024
    return 32 * 1024 * 1024, 20 * 1024 * 1024    # v7x (64 MiB per TC) / unknown


def _block_plan_3d(B, S, D, itemsize, tile_budget):
    """Pick (Tb, Ts) for x/out blocks of (Tb, Ts, D).

    Prefer Ts = S (each block is a contiguous HBM slab) and grow Tb toward the
    ~2 MiB per-block target; only tile the sequence when a single (1, S, D) slab
    does not fit the VMEM budget.  Live footprint ~= (4*Tb + 2) * Ts * D * itemsize
    (double-buffered x + out + pe, pe already in x.dtype)."""
    row_bytes = S * D * itemsize                       # one (1, S, D) slab
    if 6 * row_bytes <= tile_budget:
        Ts = S
        Tb = max(1, _TARGET_BLOCK_BYTES // row_bytes)
        Tb = min(Tb, B, max(1, (tile_budget // row_bytes - 2) // 4))
    else:
        Tb = 1
        rows = tile_budget // (6 * D * itemsize)
        Ts = min(S, max(8, (rows // 8) * 8))           # multiple of 8 (or == S)
    # v7x has 2 TensorCores: make sure non-trivial inputs never collapse to one
    # grid step along the parallel axes.  (Shrinking Tb/Ts only lowers VMEM use.)
    if pl.cdiv(S, Ts) * pl.cdiv(B, Tb) < 2:
        if B >= 2:
            Tb = (B + 1) // 2
        elif Ts == S and S >= 16:
            Ts = max(8, ((S // 2) // 8) * 8)
    return Tb, Ts


# ------------------------------- wrappers -------------------------------------

def _add_pe_3d(x, pe_s):
    """x: (B, S, D) with D % 128 == 0; pe_s: (S, D) already in x.dtype."""
    B, S, D = x.shape
    itemsize = jnp.dtype(x.dtype).itemsize
    vmem_limit, tile_budget = _vmem_budgets()
    Tb, Ts = _block_plan_3d(B, S, D, itemsize, tile_budget)
    # Batch innermost: the PE block index is constant across the inner loop, so
    # Pallas keeps it VMEM-resident (2 HBM streams instead of 3).
    grid = (pl.cdiv(S, Ts), pl.cdiv(B, Tb))
    return pl.pallas_call(
        _add_pe_kernel,
        out_shape=jax.ShapeDtypeStruct((B, S, D), x.dtype),
        grid=grid,
        in_specs=[
            pl.BlockSpec((Tb, Ts, D), lambda s, b: (b, s, 0)),
            pl.BlockSpec((Ts, D), lambda s, b: (s, 0)),
        ],
        out_specs=pl.BlockSpec((Tb, Ts, D), lambda s, b: (b, s, 0)),
        compiler_params=pltpu.CompilerParams(
            dimension_semantics=("parallel", "parallel"),
            vmem_limit_bytes=vmem_limit),
        cost_estimate=pl.CostEstimate(
            flops=B * S * D, transcendentals=0,
            bytes_accessed=2 * B * S * D * itemsize + S * D * itemsize),
    )(x, pe_s)


def _add_pe_flat(x, pe_s):
    """Tiny-input path: flatten to a lane-dense (B, S*D) layout, single block."""
    B, S, D = x.shape
    N = S * D
    itemsize = jnp.dtype(x.dtype).itemsize
    vmem_limit, _ = _vmem_budgets()
    x2 = x.reshape(B, N)
    pe_flat = pe_s.reshape(1, N)
    out2 = pl.pallas_call(
        _add_pe_kernel,
        out_shape=jax.ShapeDtypeStruct((B, N), x.dtype),
        grid=(1,),
        in_specs=[
            pl.BlockSpec((B, N), lambda c: (0, 0)),
            pl.BlockSpec((1, N), lambda c: (0, 0)),
        ],
        out_specs=pl.BlockSpec((B, N), lambda c: (0, 0)),
        compiler_params=pltpu.CompilerParams(vmem_limit_bytes=vmem_limit),
        cost_estimate=pl.CostEstimate(
            flops=B * N, transcendentals=0,
            bytes_accessed=2 * B * N * itemsize + N * itemsize),
    )(x2, pe_flat)
    return out2.reshape(B, S, D)


def add_positional_encoding(x: jnp.ndarray, pe_weight: jnp.ndarray,
                            *, small_bytes: int = _SMALL_BYTES) -> jnp.ndarray:
    """x: (B, S, D); pe_weight: (max_len, D).  Returns x + pe[:S] broadcast over batch."""
    B, S, D = x.shape
    max_len, Dw = pe_weight.shape
    assert Dw == D and S <= max_len
    itemsize = jnp.dtype(x.dtype).itemsize
    total_bytes = B * S * D * itemsize

    # Rows actually used, cast once to x.dtype (tiny copy vs. the B*S*D streams;
    # halves PE HBM traffic and VMEM residency for bf16 inputs).
    pe_s = jax.lax.slice(pe_weight, (0, 0), (S, D)).astype(x.dtype)
    # TODO(synk): for bf16/fp16 x, PyTorch's `x + fp32_buffer` promotes the output to
    # float32; we intentionally keep x.dtype (standard mixed-precision behavior).

    if total_bytes <= small_bytes:
        return _add_pe_flat(x, pe_s)
    if D % 128 == 0:
        return _add_pe_3d(x, pe_s)
    # Large but lane-unaligned D: pad D up to a multiple of 128 and reuse the 3D
    # path (robustness route; avoids sublane-starved / unlowerable flat blocks).
    Dpad = ((D + 127) // 128) * 128
    xp = jnp.pad(x, ((0, 0), (0, 0), (0, Dpad - D)))
    pep = jnp.pad(pe_s, ((0, 0), (0, Dpad - D)))
    return _add_pe_3d(xp, pep)[:, :, :D]


if __name__ == "__main__":
    # Primary smoke test (module-consistent small shape) -> flat lane-dense path.
    batch, seq_len, dim, max_len = 2, 8, 32, 16
    key = jax.random.PRNGKey(0)
    x = jax.random.normal(key, (batch, seq_len, dim), dtype=jnp.float32)
    pe_weight = _initialize_pe_weight(dim=dim, max_len=max_len)

    out = jax.block_until_ready(add_positional_encoding(x, pe_weight))
    ref = x + pe_weight[:seq_len, :][None, :, :]
    np.testing.assert_allclose(np.asarray(out), np.asarray(ref), rtol=1e-6, atol=1e-6)

    # Exercise the (Tb, Ts, D) 3D path (lane-aligned D) on a small shape.
    b2, s2, d2, ml2 = 2, 64, 128, 128
    x_big = jax.random.normal(jax.random.PRNGKey(1), (b2, s2, d2), dtype=jnp.float32)
    pe_big = _initialize_pe_weight(dim=d2, max_len=ml2)
    out_big = jax.block_until_ready(
        add_positional_encoding(x_big, pe_big, small_bytes=0))
    ref_big = x_big + pe_big[:s2, :][None, :, :]
    np.testing.assert_allclose(np.asarray(out_big), np.asarray(ref_big),
                               rtol=1e-6, atol=1e-6)

    # Exercise the padded narrow-D robustness route (D % 128 != 0, forced "large").
    b3, s3, d3, ml3 = 2, 16, 32, 32
    x_nar = jax.random.normal(jax.random.PRNGKey(2), (b3, s3, d3), dtype=jnp.float32)
    pe_nar = _initialize_pe_weight(dim=d3, max_len=ml3)
    out_nar = jax.block_until_ready(
        add_positional_encoding(x_nar, pe_nar, small_bytes=0))
    ref_nar = x_nar + pe_nar[:s3, :][None, :, :]
    np.testing.assert_allclose(np.asarray(out_nar), np.asarray(ref_nar),
                               rtol=1e-6, atol=1e-6)

    print("KERNEL_OK")
</pallas_src>

<mosaic_0001>
module attributes {stable_mosaic.version = 11 : i64} {
  func.func @_add_pe_kernel(%arg0: i32, %arg1: memref<2x256xf32, #tpu.memory_space<vmem>>, %arg2: memref<1x256xf32, #tpu.memory_space<vmem>>, %arg3: memref<2x256xf32, #tpu.memory_space<vmem>>) attributes {dimension_semantics = [#tpu.dimension_semantics<arbitrary>], iteration_bounds = array<i64: 1>, scalar_prefetch = 0 : i64, scratch_operands = 0 : i64, tpu.core_type = #tpu.core_type<tc>, window_params = [{pipeline_mode = #tpu.pipeline_mode<synchronous>, transform_indices = @transform_0, window_bounds = array<i64: 2, 256>}, {pipeline_mode = #tpu.pipeline_mode<synchronous>, transform_indices = @transform_1, window_bounds = array<i64: 1, 256>}, {pipeline_mode = #tpu.pipeline_mode<synchronous>, transform_indices = @transform_2, window_bounds = array<i64: 2, 256>}]} {
    %c0 = arith.constant 0 : index
    %c0_0 = arith.constant 0 : index
    %0 = vector.load %arg1[%c0, %c0_0] : memref<2x256xf32, #tpu.memory_space<vmem>>, vector<2x256xf32>
    %c0_1 = arith.constant 0 : index
    %c0_2 = arith.constant 0 : index
    %1 = vector.load %arg2[%c0_1, %c0_2] : memref<1x256xf32, #tpu.memory_space<vmem>>, vector<1x256xf32>
    %2 = vector.broadcast %1 : vector<1x256xf32> to vector<2x256xf32>
    %3 = arith.addf %0, %2 : vector<2x256xf32>
    %c0_3 = arith.constant 0 : index
    %c0_4 = arith.constant 0 : index
    %4 = vector.load %arg3[%c0_3, %c0_4] : memref<2x256xf32, #tpu.memory_space<vmem>>, vector<2x256xf32>
    tpu.vector_store %arg3[%c0_3, %c0_4], %3 {strides = array<i32>} : memref<2x256xf32, #tpu.memory_space<vmem>>, vector<2x256xf32>,
    return
  }
  func.func @transform_0(%arg0: i32) -> (i32, i32) {
    %c0_i32 = arith.constant 0 : i32
    %c0_i32_0 = arith.constant 0 : i32
    %c0_i32_1 = arith.constant 0 : i32
    return %c0_i32, %c0_i32_0 : i32, i32
  }
  func.func @transform_1(%arg0: i32) -> (i32, i32) {
    %c0_i32 = arith.constant 0 : i32
    %c0_i32_0 = arith.constant 0 : i32
    %c0_i32_1 = arith.constant 0 : i32
    return %c0_i32, %c0_i32_0 : i32, i32
  }
  func.func @transform_2(%arg0: i32) -> (i32, i32) {
    %c0_i32 = arith.constant 0 : i32
    %c0_i32_0 = arith.constant 0 : i32
    %c0_i32_1 = arith.constant 0 : i32
    return %c0_i32, %c0_i32_0 : i32, i32
  }
}

</mosaic_0001>

<llo_original>
// kernel: tpu_custom_call.1
$region0: #{tpu_custom_call.1}
  #allocation0 [shape = 'u32[]', space=smem, size = 0x4, offset = 0x4, fixed_abs, tag = 'smem constant byte address 0x4 - core index']
  #allocation1 [shape = 'u32[72,128]{1,0:T(1,128)}', space=vmem, size = 0x9000, scoped, tag = 'internal scratch']
  %s0 = inlined_call_operand.hbm [shape: f32[2,256], index: 0, kind: input, shape index: {}]
  %s1 = inlined_call_operand.hbm [shape: f32[1,256], index: 1, kind: input, shape index: {}]
  %s2 = inlined_call_operand.hbm [shape: f32[2,256], index: 2, kind: output, shape index: {}]
  %s3 = sld [smem:[#allocation0]]
  $region26: #{tpu_custom_call.1} parent=0
    _
  %s5 = ssub.s32 1, %s3
  %s6 = scalar_select 0, %s5, %s3
  $region1: #{tpu_custom_call.1} parent=0
    #allocation2 [shape = 'u8[2048]{0}', space=vmem, size = 0x800, scoped, tag = 'input window, operand 0, single buffered']
    #allocation3 [shape = 's32[1]{0}', space=sflag, size = 0x4, scoped, tag = 'scoped memory for tpu_custom_call.1']
    #allocation4 [shape = 's32[1]{0}', space=sflag, size = 0x4, scoped, tag = 'scoped memory for tpu_custom_call.1']
    #allocation5 [shape = 'u8[1024]{0}', space=vmem, size = 0x400, scoped, tag = 'input window, operand 1, single buffered']
    #allocation6 [shape = 's32[1]{0}', space=sflag, size = 0x4, scoped, tag = 'scoped memory for tpu_custom_call.1']
    #allocation7 [shape = 'u8[2048]{0}', space=vmem, size = 0x800, scoped, tag = 'output window, operand 0, single buffered']
    %7 = vsyncpa [#allocation3], 0
    %8 = vsyncpa [#allocation6], 0
    %9 = vsyncpa [#allocation4], 0
    // Predicated region
    $region2: #{tpu_custom_call.1} parent=1 // pred_check
      _
    $region3: #{tpu_custom_call.1} parent=1 // pred_check_branch
      %11 = sbr.rel (0) target = $region5
    $region4: #{tpu_custom_call.1} parent=1 // pred_region
      %13 = vsyncadd [#allocation3], 0
      %s15 = sshll.u32 %s0, 4
      %s16 = int_to_ptr.hbm [resolvable:$true] %s15
      %s17 = sshll.u32 [#allocation2], 4
      %s18 = int_to_ptr.vmem [resolvable:$true] %s17
      %20 = dma.hbm_to_vmem [thread:$0]  %s16, 64, %s18, [#allocation3]
    $region5: #{tpu_custom_call.1} parent=1 // pred_fallthru
      _
    // Predicated region
    $region6: #{tpu_custom_call.1} parent=1 // pred_check
      _
    $region7: #{tpu_custom_call.1} parent=1 // pred_check_branch
      %22 = sbr.rel (0) target = $region9
    $region8: #{tpu_custom_call.1} parent=1 // pred_region
      %24 = vsyncadd [#allocation6], 0
      %s26 = sshll.u32 %s1, 4
      %s27 = int_to_ptr.hbm [resolvable:$true] %s26
      %s28 = sshll.u32 [#allocation5], 4
      %s29 = int_to_ptr.vmem [resolvable:$true] %s28
      %31 = dma.hbm_to_vmem [thread:$0]  %s27, 32, %s29, [#allocation6]
    $region9: #{tpu_custom_call.1} parent=1 // pred_fallthru
      _
    // Predicated region
    $region10: #{tpu_custom_call.1} parent=1 // pred_check
      _
    $region11: #{tpu_custom_call.1} parent=1 // pred_check_branch
      %33 = sbr.rel (0) target = $region13
    $region12: #{tpu_custom_call.1} parent=1 // pred_region
      %35 = dma.done [#allocation3], 64
    $region13: #{tpu_custom_call.1} parent=1 // pred_fallthru
      _
    // Predicated region
    $region14: #{tpu_custom_call.1} parent=1 // pred_check
      _
    $region15: #{tpu_custom_call.1} parent=1 // pred_check_branch
      %37 = sbr.rel (0) target = $region17
    $region16: #{tpu_custom_call.1} parent=1 // pred_region
      %39 = dma.done [#allocation6], 32
    $region17: #{tpu_custom_call.1} parent=1 // pred_fallthru
      _
    %v40 = vld [vmem:[#allocation2] sm:$0xf]
    %v41 = vld [vmem:[#allocation5] sm:$0x3]
    %v43 = vperm.slane %v41, 0
    %v44 = vperm.slane %v41, 1
    %v45 = vrot.slane %v44, 6
    %vm46 = vcmask 1041408
    %v47 = vsel %vm46, %v43, %v45
    %v49 = vadd.f32 %v40, %v47
    %50 = vst [vmem:[#allocation7] sm:$0xf] %v49
    // Predicated region
    $region18: #{tpu_custom_call.1} parent=1 // pred_check
      _
    $region19: #{tpu_custom_call.1} parent=1 // pred_check_branch
      %52 = sbr.rel (0) target = $region21
    $region20: #{tpu_custom_call.1} parent=1 // pred_region
      %54 = vsyncadd [#allocation4], 0
      %s56 = sshll.u32 [#allocation7], 4
      %s57 = int_to_ptr.vmem [resolvable:$true] %s56
      %s58 = sshll.u32 %s2, 4
      %s59 = int_to_ptr.hbm [resolvable:$true] %s58
      %61 = dma.vmem_to_hbm [thread:$0]  %s57, 64, %s59, [#allocation4]
    $region21: #{tpu_custom_call.1} parent=1 // pred_fallthru
      _
    // Predicated region
    $region22: #{tpu_custom_call.1} parent=1 // pred_check
      _
    $region23: #{tpu_custom_call.1} parent=1 // pred_check_branch
      %63 = sbr.rel (0) target = $region25
    $region24: #{tpu_custom_call.1} parent=1 // pred_region
      %65 = dma.done [#allocation4], 64
    $region25: #{tpu_custom_call.1} parent=1 // pred_fallthru
      _
    %66 = vsyncpa [#allocation3], 1
    %67 = vsyncpa [#allocation6], 1
    %68 = vsyncpa [#allocation4], 1

</llo_original>
